<compile_context>
chip_gen: v7x
topology: tpu7x:2x2x1
jax: 0.10.0
libtpu: 0.0.40
codegen_flags: <defaults>
</compile_context>

<pallas_src>
import functools

import jax
import jax.numpy as jnp
from jax.experimental import pallas as pl
from jax.experimental.pallas import tpu as pltpu


# ---------------------------------------------------------------------------
# helpers
# ---------------------------------------------------------------------------

def _round_up(x: int, m: int) -> int:
    return (x + m - 1) // m * m


def _pick_tile(dim_pad: int, target: int, mult: int) -> int:
    """Largest tile <= target that is a multiple of `mult` and divides dim_pad.
    `dim_pad` must already be a multiple of `mult`, so this always terminates."""
    t = (min(target, dim_pad) // mult) * mult
    while dim_pad % t != 0:
        t -= mult
    return t


def _pad2d(a, rows: int, cols: int):
    r, c = a.shape
    if r == rows and c == cols:
        return a
    return jnp.pad(a, ((0, rows - r), (0, cols - c)))


# ---------------------------------------------------------------------------
# kernel 1: fused multi-layer MLP (hidden activations stay in VMEM)
# ---------------------------------------------------------------------------

def _fused_mlp_kernel(*refs, num_layers: int):
    # refs = (x_ref, w1, b1, w2, b2, ..., wL, bL, o_ref)
    x_ref = refs[0]
    o_ref = refs[-1]
    h = x_ref[...]                      # (tm, K) compute dtype (bf16)
    for l in range(num_layers):
        w_ref = refs[1 + 2 * l]         # (K_l, N_l) bf16
        b_ref = refs[2 + 2 * l]         # (1, N_l)   f32
        y = jnp.dot(h.astype(w_ref.dtype), w_ref[...],
                    preferred_element_type=jnp.float32) + b_ref[...]
        if l < num_layers - 1:
            y = jnp.maximum(y, 0.0)
        h = y                           # stays f32 in VMEM / vregs
    o_ref[...] = h.astype(o_ref.dtype)


def _mlp_fused(x2d, layers, *, tm=256, compute_dtype=jnp.bfloat16,
               out_dtype=jnp.float32):
    """x2d: (M, K). layers: list of ((K_l, N_l) bf16 weight, (1, N_l) f32 bias)."""
    M, K = x2d.shape
    num_layers = len(layers)
    N_out = layers[-1][0].shape[1]      # already padded to a multiple of 128

    tm = min(tm, _round_up(M, 8))
    M_pad = _round_up(M, tm)
    xp = _pad2d(x2d, M_pad, K).astype(compute_dtype)

    flat_params = []
    in_specs = [pl.BlockSpec((tm, K), lambda i: (i, 0))]
    for wt, b2 in layers:
        kl, nl = wt.shape
        flat_params += [wt, b2]
        # Constant index maps: fetched once, resident across the grid.
        in_specs.append(pl.BlockSpec((kl, nl), lambda i: (0, 0)))
        in_specs.append(pl.BlockSpec((1, nl), lambda i: (0, 0)))

    flops = 2 * M_pad * sum(wt.shape[0] * wt.shape[1] for wt, _ in layers)
    bytes_accessed = (
        xp.size * xp.dtype.itemsize
        + sum(wt.size * wt.dtype.itemsize + 4 * b.size for wt, b in layers)
        + M_pad * N_out * 4)

    kernel = functools.partial(_fused_mlp_kernel, num_layers=num_layers)
    out = pl.pallas_call(
        kernel,
        out_shape=jax.ShapeDtypeStruct((M_pad, N_out), out_dtype),
        grid=(M_pad // tm,),
        in_specs=in_specs,
        out_specs=pl.BlockSpec((tm, N_out), lambda i: (i, 0)),
        compiler_params=pltpu.CompilerParams(
            dimension_semantics=("parallel",),
            vmem_limit_bytes=32 * 1024 * 1024),
        cost_estimate=pl.CostEstimate(flops=flops, transcendentals=0,
                                      bytes_accessed=bytes_accessed),
    )(xp, *flat_params)
    return out[:M]


# ---------------------------------------------------------------------------
# kernel 2: single Linear, M/N/K tiled with f32 accumulator (fallback path)
# ---------------------------------------------------------------------------

def _linear_tiled_kernel(x_ref, w_ref, b_ref, o_ref, acc_ref, *, apply_relu: bool):
    @pl.when(pl.program_id(2) == 0)
    def _init():
        acc_ref[...] = jnp.zeros_like(acc_ref)

    acc_ref[...] += jnp.dot(x_ref[...], w_ref[...],
                            preferred_element_type=jnp.float32)

    @pl.when(pl.program_id(2) == pl.num_programs(2) - 1)
    def _finalize():
        y = acc_ref[...] + b_ref[...]
        if apply_relu:
            y = jnp.maximum(y, 0.0)
        o_ref[...] = y.astype(o_ref.dtype)


def pallas_linear_tiled(x, wt, b2, *, relu: bool, tm=256, tn=512, tk=512,
                        compute_dtype=jnp.bfloat16, out_dtype=jnp.float32):
    """y = x @ wt + b2.  x: (M, K), wt: (K, N) (pre-transposed), b2: (1, N)."""
    M, K = x.shape
    N = wt.shape[1]

    tm = min(tm, _round_up(M, 8))
    M_pad = _round_up(M, tm)
    K_pad = _round_up(K, 128)
    N_pad = _round_up(N, 128)
    tk = _pick_tile(K_pad, tk, 128)
    tn = _pick_tile(N_pad, tn, 128)

    xp = _pad2d(x, M_pad, K_pad).astype(compute_dtype)
    wp = _pad2d(wt, K_pad, N_pad).astype(compute_dtype)
    bp = _pad2d(b2, 1, N_pad).astype(jnp.float32)

    grid = (M_pad // tm, N_pad // tn, K_pad // tk)
    flops = 2 * M_pad * K_pad * N_pad
    bytes_accessed = (xp.size * xp.dtype.itemsize
                      + wp.size * wp.dtype.itemsize
                      + bp.size * 4
                      + M_pad * N_pad * jnp.dtype(out_dtype).itemsize)

    kernel = functools.partial(_linear_tiled_kernel, apply_relu=relu)
    out = pl.pallas_call(
        kernel,
        out_shape=jax.ShapeDtypeStruct((M_pad, N_pad), out_dtype),
        grid=grid,
        in_specs=[
            pl.BlockSpec((tm, tk), lambda i, j, k: (i, k)),   # activations
            pl.BlockSpec((tk, tn), lambda i, j, k: (k, j)),   # weight tile
            pl.BlockSpec((1, tn), lambda i, j, k: (0, j)),    # bias tile
        ],
        out_specs=pl.BlockSpec((tm, tn), lambda i, j, k: (i, j)),
        scratch_shapes=[pltpu.VMEM((tm, tn), jnp.float32)],
        compiler_params=pltpu.CompilerParams(
            dimension_semantics=("parallel", "parallel", "arbitrary"),
            vmem_limit_bytes=32 * 1024 * 1024),
        cost_estimate=pl.CostEstimate(flops=flops, transcendentals=0,
                                      bytes_accessed=bytes_accessed),
    )(xp, wp, bp)
    return out[:M, :N]


# ---------------------------------------------------------------------------
# parameter handling + forward pass (matches the torch MLP semantics)
# ---------------------------------------------------------------------------

def init_mlp_params(key, input_dim, hidden_dim, output_dim, num_layers):
    """Torch-layout params: list of (w (out, in) f32, b (out,) f32)."""
    h = [hidden_dim] * (num_layers - 1)
    dims = list(zip([input_dim] + h, h + [output_dim]))
    params = []
    for n_in, n_out in dims:
        key, kw, kb = jax.random.split(key, 3)
        bound = 1.0 / jnp.sqrt(jnp.float32(n_in))
        w = jax.random.uniform(kw, (n_out, n_in), jnp.float32, -bound, bound)
        b = jax.random.uniform(kb, (n_out,), jnp.float32, -bound, bound)
        params.append((w, b))
    return params


def prepare_params(params, compute_dtype=jnp.bfloat16):
    """One-time conversion to device layout: (K, N) bf16 weights + (1, N) f32
    biases, final layer zero-padded to a lane-dense multiple of 128."""
    prepared = []
    n = len(params)
    output_dim = params[-1][0].shape[0]
    for i, (w, b) in enumerate(params):
        wt = jnp.asarray(w, jnp.float32).T.astype(compute_dtype)   # (K, N)
        b2 = jnp.asarray(b, jnp.float32).reshape(1, -1)            # (1, N)
        if i == n - 1:
            N = wt.shape[1]
            N_pad = _round_up(N, 128)
            if N_pad != N:
                wt = jnp.pad(wt, ((0, 0), (0, N_pad - N)))
                b2 = jnp.pad(b2, ((0, 0), (0, N_pad - N)))
        prepared.append((wt, b2))
    return prepared, output_dim


def mlp_forward(x, layers, output_dim, *, fuse=True, tm=256,
                compute_dtype=jnp.bfloat16,
                fused_weight_budget=20 * 1024 * 1024):
    """x: (B, S, input_dim) -> (B, S, output_dim)."""
    B, S, D = x.shape
    x2d = x.reshape(B * S, D)
    # 2x accounts for default double-buffering of the resident param blocks.
    weight_bytes = sum(2 * (wt.size * wt.dtype.itemsize + 4 * b.size)
                       for wt, b in layers)
    if fuse and weight_bytes <= fused_weight_budget:
        out = _mlp_fused(x2d, layers, tm=tm, compute_dtype=compute_dtype)
    else:
        h = x2d
        n = len(layers)
        for i, (wt, b2) in enumerate(layers):
            last = i == n - 1
            # Hidden activations kept in bf16 between layers (numerically
            # identical to casting at the next dot input), final layer in f32.
            h = pallas_linear_tiled(
                h, wt, b2, relu=not last, tm=tm,
                compute_dtype=compute_dtype,
                out_dtype=jnp.float32 if last else compute_dtype)
        out = h
    return out[:, :output_dim].reshape(B, S, output_dim)


def mlp_reference(x, params, compute_dtype=jnp.float32):
    """Pure-JAX reference with the same per-dot input cast as the kernels."""
    h = x
    n = len(params)
    for i, (w, b) in enumerate(params):
        y = jnp.dot(h.astype(compute_dtype), w.T.astype(compute_dtype),
                    preferred_element_type=jnp.float32) + b
        h = jnp.maximum(y, 0.0) if i < n - 1 else y
    return h


# ---------------------------------------------------------------------------
# demo
# ---------------------------------------------------------------------------

if __name__ == "__main__":
    key = jax.random.PRNGKey(0)
    B, S = 2, 8
    input_dim, hidden_dim, output_dim, num_layers = 32, 32, 4, 3

    kx, kp = jax.random.split(key)
    x = jax.random.normal(kx, (B, S, input_dim), jnp.float32)
    params = init_mlp_params(kp, input_dim, hidden_dim, output_dim, num_layers)
    layers, out_dim = prepare_params(params)

    # Fused path (default) and tiled fallback path, both exercised.
    out_fused = jax.block_until_ready(mlp_forward(x, layers, out_dim, fuse=True))
    out_tiled = jax.block_until_ready(mlp_forward(x, layers, out_dim, fuse=False))

    ref_bf16 = mlp_reference(x, params, compute_dtype=jnp.bfloat16)
    ref_f32 = mlp_reference(x, params, compute_dtype=jnp.float32)

    assert out_fused.shape == (B, S, output_dim)
    assert out_tiled.shape == (B, S, output_dim)
    assert jnp.allclose(out_fused, ref_bf16, atol=1e-2, rtol=1e-2)
    assert jnp.allclose(out_tiled, ref_bf16, atol=1e-2, rtol=1e-2)
    assert jnp.allclose(out_fused, ref_f32, atol=1e-1, rtol=1e-1)
    print("KERNEL_OK")
</pallas_src>

<mosaic_0001>
module attributes {stable_mosaic.version = 11 : i64} {
  func.func @_fused_mlp_kernel(%arg0: i32, %arg1: memref<16x32xbf16, #tpu.memory_space<vmem>>, %arg2: memref<32x32xbf16, #tpu.memory_space<vmem>>, %arg3: memref<1x32xf32, #tpu.memory_space<vmem>>, %arg4: memref<32x32xbf16, #tpu.memory_space<vmem>>, %arg5: memref<1x32xf32, #tpu.memory_space<vmem>>, %arg6: memref<32x128xbf16, #tpu.memory_space<vmem>>, %arg7: memref<1x128xf32, #tpu.memory_space<vmem>>, %arg8: memref<16x128xf32, #tpu.memory_space<vmem>>) attributes {dimension_semantics = [#tpu.dimension_semantics<parallel>], iteration_bounds = array<i64: 1>, scalar_prefetch = 0 : i64, scratch_operands = 0 : i64, tpu.core_type = #tpu.core_type<tc>, window_params = [{transform_indices = @transform_0, window_bounds = array<i64: 16, 32>}, {pipeline_mode = #tpu.pipeline_mode<synchronous>, transform_indices = @transform_1, window_bounds = array<i64: 32, 32>}, {pipeline_mode = #tpu.pipeline_mode<synchronous>, transform_indices = @transform_2, window_bounds = array<i64: 1, 32>}, {pipeline_mode = #tpu.pipeline_mode<synchronous>, transform_indices = @transform_3, window_bounds = array<i64: 32, 32>}, {pipeline_mode = #tpu.pipeline_mode<synchronous>, transform_indices = @transform_4, window_bounds = array<i64: 1, 32>}, {pipeline_mode = #tpu.pipeline_mode<synchronous>, transform_indices = @transform_5, window_bounds = array<i64: 32, 128>}, {pipeline_mode = #tpu.pipeline_mode<synchronous>, transform_indices = @transform_6, window_bounds = array<i64: 1, 128>}, {transform_indices = @transform_7, window_bounds = array<i64: 16, 128>}]} {
    %c0 = arith.constant 0 : index
    %c0_0 = arith.constant 0 : index
    %0 = vector.load %arg1[%c0, %c0_0] : memref<16x32xbf16, #tpu.memory_space<vmem>>, vector<16x32xbf16>
    %c0_1 = arith.constant 0 : index
    %c0_2 = arith.constant 0 : index
    %1 = vector.load %arg2[%c0_1, %c0_2] : memref<32x32xbf16, #tpu.memory_space<vmem>>, vector<32x32xbf16>
    %cst = arith.constant dense<0.000000e+00> : vector<16x32xf32>
    %2 = tpu.matmul %0, %1, %cst {dimension_numbers = #tpu.dot_dimension_numbers<[1], [0], [0], [1], [0, 0, 1, 1], [], []>} : vector<16x32xbf16>, vector<32x32xbf16>, vector<16x32xf32> -> vector<16x32xf32>
    %c0_3 = arith.constant 0 : index
    %c0_4 = arith.constant 0 : index
    %3 = vector.load %arg3[%c0_3, %c0_4] : memref<1x32xf32, #tpu.memory_space<vmem>>, vector<1x32xf32>
    %4 = vector.broadcast %3 : vector<1x32xf32> to vector<16x32xf32>
    %5 = arith.addf %2, %4 : vector<16x32xf32>
    %cst_5 = arith.constant 0.000000e+00 : f32
    %6 = vector.broadcast %cst_5 : f32 to vector<16x32xf32>
    %7 = arith.maximumf %5, %6 : vector<16x32xf32>
    %8 = arith.truncf %7 : vector<16x32xf32> to vector<16x32xbf16>
    %c0_6 = arith.constant 0 : index
    %c0_7 = arith.constant 0 : index
    %9 = vector.load %arg4[%c0_6, %c0_7] : memref<32x32xbf16, #tpu.memory_space<vmem>>, vector<32x32xbf16>
    %cst_8 = arith.constant dense<0.000000e+00> : vector<16x32xf32>
    %10 = tpu.matmul %8, %9, %cst_8 {dimension_numbers = #tpu.dot_dimension_numbers<[1], [0], [0], [1], [0, 0, 1, 1], [], []>} : vector<16x32xbf16>, vector<32x32xbf16>, vector<16x32xf32> -> vector<16x32xf32>
    %c0_9 = arith.constant 0 : index
    %c0_10 = arith.constant 0 : index
    %11 = vector.load %arg5[%c0_9, %c0_10] : memref<1x32xf32, #tpu.memory_space<vmem>>, vector<1x32xf32>
    %12 = vector.broadcast %11 : vector<1x32xf32> to vector<16x32xf32>
    %13 = arith.addf %10, %12 : vector<16x32xf32>
    %cst_11 = arith.constant 0.000000e+00 : f32
    %14 = vector.broadcast %cst_11 : f32 to vector<16x32xf32>
    %15 = arith.maximumf %13, %14 : vector<16x32xf32>
    %16 = arith.truncf %15 : vector<16x32xf32> to vector<16x32xbf16>
    %c0_12 = arith.constant 0 : index
    %c0_13 = arith.constant 0 : index
    %17 = vector.load %arg6[%c0_12, %c0_13] : memref<32x128xbf16, #tpu.memory_space<vmem>>, vector<32x128xbf16>
    %cst_14 = arith.constant dense<0.000000e+00> : vector<16x128xf32>
    %18 = tpu.matmul %16, %17, %cst_14 {dimension_numbers = #tpu.dot_dimension_numbers<[1], [0], [0], [1], [0, 0, 1, 1], [], []>} : vector<16x32xbf16>, vector<32x128xbf16>, vector<16x128xf32> -> vector<16x128xf32>
    %c0_15 = arith.constant 0 : index
    %c0_16 = arith.constant 0 : index
    %19 = vector.load %arg7[%c0_15, %c0_16] : memref<1x128xf32, #tpu.memory_space<vmem>>, vector<1x128xf32>
    %20 = vector.broadcast %19 : vector<1x128xf32> to vector<16x128xf32>
    %21 = arith.addf %18, %20 : vector<16x128xf32>
    %c0_17 = arith.constant 0 : index
    %c0_18 = arith.constant 0 : index
    %22 = vector.load %arg8[%c0_17, %c0_18] : memref<16x128xf32, #tpu.memory_space<vmem>>, vector<16x128xf32>
    tpu.vector_store %arg8[%c0_17, %c0_18], %21 {strides = array<i32>} : memref<16x128xf32, #tpu.memory_space<vmem>>, vector<16x128xf32>,
    return
  }
  func.func @transform_0(%arg0: i32) -> (i32, i32) {
    %c0_i32 = arith.constant 0 : i32
    %c0_i32_0 = arith.constant 0 : i32
    return %arg0, %c0_i32 : i32, i32
  }
  func.func @transform_1(%arg0: i32) -> (i32, i32) {
    %c0_i32 = arith.constant 0 : i32
    %c0_i32_0 = arith.constant 0 : i32
    %c0_i32_1 = arith.constant 0 : i32
    return %c0_i32, %c0_i32_0 : i32, i32
  }
  func.func @transform_2(%arg0: i32) -> (i32, i32) {
    %c0_i32 = arith.constant 0 : i32
    %c0_i32_0 = arith.constant 0 : i32
    %c0_i32_1 = arith.constant 0 : i32
    return %c0_i32, %c0_i32_0 : i32, i32
  }
  func.func @transform_3(%arg0: i32) -> (i32, i32) {
    %c0_i32 = arith.constant 0 : i32
    %c0_i32_0 = arith.constant 0 : i32
    %c0_i32_1 = arith.constant 0 : i32
    return %c0_i32, %c0_i32_0 : i32, i32
  }
  func.func @transform_4(%arg0: i32) -> (i32, i32) {
    %c0_i32 = arith.constant 0 : i32
    %c0_i32_0 = arith.constant 0 : i32
    %c0_i32_1 = arith.constant 0 : i32
    return %c0_i32, %c0_i32_0 : i32, i32
  }
  func.func @transform_5(%arg0: i32) -> (i32, i32) {
    %c0_i32 = arith.constant 0 : i32
    %c0_i32_0 = arith.constant 0 : i32
    %c0_i32_1 = arith.constant 0 : i32
    return %c0_i32, %c0_i32_0 : i32, i32
  }
  func.func @transform_6(%arg0: i32) -> (i32, i32) {
    %c0_i32 = arith.constant 0 : i32
    %c0_i32_0 = arith.constant 0 : i32
    %c0_i32_1 = arith.constant 0 : i32
    return %c0_i32, %c0_i32_0 : i32, i32
  }
  func.func @transform_7(%arg0: i32) -> (i32, i32) {
    %c0_i32 = arith.constant 0 : i32
    %c0_i32_0 = arith.constant 0 : i32
    return %arg0, %c0_i32 : i32, i32
  }
}

</mosaic_0001>

<llo_original>
// kernel: tpu_custom_call.1
$region0: #{tpu_custom_call.1}
  #allocation0 [shape = 'u32[]', space=smem, size = 0x4, offset = 0x4, fixed_abs, tag = 'smem constant byte address 0x4 - core index']
  #allocation1 [shape = 'u32[144,128]{1,0:T(1,128)}', space=vmem, size = 0x12000, scoped, tag = 'internal scratch']
  %s0 = inlined_call_operand.hbm [shape: bf16[16,32], index: 0, kind: input, shape index: {}]
  %s1 = inlined_call_operand.hbm [shape: bf16[32,32], index: 1, kind: input, shape index: {}]
  %s2 = inlined_call_operand.vmem [shape: f32[1,32], index: 2, kind: input, shape index: {}]
  %s3 = inlined_call_operand.hbm [shape: bf16[32,32], index: 3, kind: input, shape index: {}]
  %s4 = inlined_call_operand.vmem [shape: f32[1,32], index: 4, kind: input, shape index: {}]
  %s5 = inlined_call_operand.vmem [shape: bf16[32,128], index: 5, kind: input, shape index: {}]
  %s6 = inlined_call_operand.vmem [shape: f32[1,128], index: 6, kind: input, shape index: {}]
  %s7 = inlined_call_operand.hbm [shape: f32[16,128], index: 7, kind: output, shape index: {}]
  %s8 = sld [smem:[#allocation0]]
  $region50: #{tpu_custom_call.1} parent=0
    _
  %s10 = ssub.s32 1, %s8
  %s11 = scalar_select 0, %s10, %s8
  $region1: #{tpu_custom_call.1} parent=0
    #allocation2 [shape = 'u8[4096]{0}', space=vmem, size = 0x1000, scoped, tag = 'input window, operand 0, single buffered']
    #allocation3 [shape = 's32[1]{0}', space=sflag, size = 0x4, scoped, tag = 'scoped memory for tpu_custom_call.1']
    #allocation4 [shape = 's32[1]{0}', space=sflag, size = 0x4, scoped, tag = 'scoped memory for tpu_custom_call.1']
    #allocation5 [shape = 'u8[8192]{0}', space=vmem, size = 0x2000, scoped, tag = 'input window, operand 1, single buffered']
    #allocation6 [shape = 's32[1]{0}', space=sflag, size = 0x4, scoped, tag = 'scoped memory for tpu_custom_call.1']
    #allocation7 [shape = 'u8[8192]{0}', space=vmem, size = 0x2000, scoped, tag = 'input window, operand 3, single buffered']
    #allocation8 [shape = 'u8[8192]{0}', space=vmem, size = 0x2000, scoped, tag = 'output window, operand 0, single buffered']
    %12 = vsyncpa [#allocation3], 0
    %13 = vsyncpa [#allocation6], 0
    %14 = vsyncpa [#allocation4], 0
    // Predicated region
    $region2: #{tpu_custom_call.1} parent=1 // pred_check
      _
    $region3: #{tpu_custom_call.1} parent=1 // pred_check_branch
      %16 = sbr.rel (0) target = $region5
    $region4: #{tpu_custom_call.1} parent=1 // pred_region
      %s18 = ssub.s32 128, 128
      %19 = vsyncadd [#allocation3], %s18
      %s20 = sshll.u32 [#allocation2], 4
      %s21 = int_to_ptr.vmem [resolvable:$true] %s20
      %26 = dma.hbm_to_vmem [thread:$0]  %s0, 128, %s21, [#allocation3], 64, 64, 4
    $region5: #{tpu_custom_call.1} parent=1 // pred_fallthru
      _
    // Predicated region
    $region6: #{tpu_custom_call.1} parent=1 // pred_check
      _
    $region7: #{tpu_custom_call.1} parent=1 // pred_check_branch
      %28 = sbr.rel (0) target = $region9
    $region8: #{tpu_custom_call.1} parent=1 // pred_region
      %s30 = ssub.s32 256, 256
      %31 = vsyncadd [#allocation6], %s30
      %s32 = sshll.u32 [#allocation5], 4
      %s33 = int_to_ptr.vmem [resolvable:$true] %s32
      %38 = dma.hbm_to_vmem [thread:$0]  %s1, 256, %s33, [#allocation6], 64, 64, 4
    $region9: #{tpu_custom_call.1} parent=1 // pred_fallthru
      _
    // Predicated region
    $region10: #{tpu_custom_call.1} parent=1 // pred_check
      _
    $region11: #{tpu_custom_call.1} parent=1 // pred_check_branch
      %40 = sbr.rel (0) target = $region13
    $region12: #{tpu_custom_call.1} parent=1 // pred_region
      _
    $region13: #{tpu_custom_call.1} parent=1 // pred_fallthru
      _
    // Predicated region
    $region14: #{tpu_custom_call.1} parent=1 // pred_check
      _
    $region15: #{tpu_custom_call.1} parent=1 // pred_check_branch
      %42 = sbr.rel (0) target = $region17
    $region16: #{tpu_custom_call.1} parent=1 // pred_region
      %s44 = ssub.s32 256, 256
      %45 = vsyncadd [#allocation6], %s44
      %s46 = sshll.u32 [#allocation7], 4
      %s47 = int_to_ptr.vmem [resolvable:$true] %s46
      %52 = dma.hbm_to_vmem [thread:$0]  %s3, 256, %s47, [#allocation6], 64, 64, 4
    $region17: #{tpu_custom_call.1} parent=1 // pred_fallthru
      _
    // Predicated region
    $region18: #{tpu_custom_call.1} parent=1 // pred_check
      _
    $region19: #{tpu_custom_call.1} parent=1 // pred_check_branch
      %54 = sbr.rel (0) target = $region21
    $region20: #{tpu_custom_call.1} parent=1 // pred_region
      _
    $region21: #{tpu_custom_call.1} parent=1 // pred_fallthru
      _
    // Predicated region
    $region22: #{tpu_custom_call.1} parent=1 // pred_check
      _
    $region23: #{tpu_custom_call.1} parent=1 // pred_check_branch
      %56 = sbr.rel (0) target = $region25
    $region24: #{tpu_custom_call.1} parent=1 // pred_region
      _
    $region25: #{tpu_custom_call.1} parent=1 // pred_fallthru
      _
    // Predicated region
    $region26: #{tpu_custom_call.1} parent=1 // pred_check
      _
    $region27: #{tpu_custom_call.1} parent=1 // pred_check_branch
      %58 = sbr.rel (0) target = $region29
    $region28: #{tpu_custom_call.1} parent=1 // pred_region
      _
    $region29: #{tpu_custom_call.1} parent=1 // pred_fallthru
      _
    // Predicated region
    $region30: #{tpu_custom_call.1} parent=1 // pred_check
      _
    $region31: #{tpu_custom_call.1} parent=1 // pred_check_branch
      %60 = sbr.rel (0) target = $region33
    $region32: #{tpu_custom_call.1} parent=1 // pred_region
      %61 = dma.done [#allocation3], 128
    $region33: #{tpu_custom_call.1} parent=1 // pred_fallthru
      _
    // Predicated region
    $region34: #{tpu_custom_call.1} parent=1 // pred_check
      _
    $region35: #{tpu_custom_call.1} parent=1 // pred_check_branch
      %63 = sbr.rel (0) target = $region37
    $region36: #{tpu_custom_call.1} parent=1 // pred_region
      %64 = dma.done [#allocation6], 256
    $region37: #{tpu_custom_call.1} parent=1 // pred_fallthru
      _
    // Predicated region
    $region38: #{tpu_custom_call.1} parent=1 // pred_check
      _
    $region39: #{tpu_custom_call.1} parent=1 // pred_check_branch
      %66 = sbr.rel (0) target = $region41
    $region40: #{tpu_custom_call.1} parent=1 // pred_region
      %67 = dma.done [#allocation6], 256
    $region41: #{tpu_custom_call.1} parent=1 // pred_fallthru
      _
    %v69 = vld [vmem:[#allocation2] sm:$0xf]
    %v70 = vld [vmem:[#allocation2 + $0x4] sm:$0xf]
    %v71 = vld [vmem:[#allocation5] sm:$0xf]
    %v72 = vld [vmem:[#allocation5 + $0x4] sm:$0xf]
    %v73 = vld [vmem:[#allocation5 + $0x8] sm:$0xf]
    %v74 = vld [vmem:[#allocation5 + $0xc] sm:$0xf]
    %v75 = vld [vmem:[%s2] sm:$0x1]
    %v77 = vlaneseq
    %v78 = vshrl.u32 %v77, 7
    %v79 = vsub.s32 0, %v78
    %v80 = vrot.slane %v75, %v79
    %v84 = vunpack.c.l.b16 %v69
    %v85 = vunpack.c.l.b16 %v70
    %v86 = vpack.c.b16 %v85, %v84
    %v91 = vunpack.c.l.b16 %v71
    %v92 = vunpack.c.l.b16 %v72
    %v93 = vunpack.c.l.b16 %v73
    %v94 = vunpack.c.l.b16 %v74
    %v95 = vpack.c.b16 %v92, %v91
    %v96 = vpack.c.b16 %v94, %v93
    %vm99 = vcmask 261120
    %v101 = vsel %vm99, %v86, 0
    %103 = vmatprep.subr.bf16.mxu0 0
    %104 = vmatpush1.bf16.msra.mxu0 %v95
    %105 = vmatprep.subr.bf16.mxu0 0
    %106 = vmatpush1.bf16.msra.mxu0 %v96
    %107 = vmatprep.subr.bf16.mxu0 0
    %108 = vmatpush1.bf16.msra.mxu0 0
    %109 = vmatprep.subr.bf16.mxu0 0
    %110 = vmatpush1.bf16.msra.mxu0 0
    %111 = vmatprep.subr.bf16.mxu0 0
    %112 = vmatpush1.bf16.msra.mxu0 0
    %113 = vmatprep.subr.bf16.mxu0 0
    %114 = vmatpush1.bf16.msra.mxu0 0
    %115 = vmatprep.subr.bf16.mxu0 0
    %116 = vmatpush1.bf16.msra.mxu0 0
    %117 = vmatprep.subr.bf16.mxu0 0
    %118 = vmatpush1.bf16.msra.mxu0 0
    %119 = vmatprep.subr.bf16.mxu0 0
    %120 = vmatpush1.bf16.msra.mxu0 0
    %121 = vmatprep.subr.bf16.mxu0 0
    %122 = vmatpush1.bf16.msra.mxu0 0
    %123 = vmatprep.subr.bf16.mxu0 0
    %124 = vmatpush1.bf16.msra.mxu0 0
    %125 = vmatprep.subr.bf16.mxu0 0
    %126 = vmatpush1.bf16.msra.mxu0 0
    %127 = vmatprep.subr.bf16.mxu0 0
    %128 = vmatpush1.bf16.msra.mxu0 0
    %129 = vmatprep.subr.bf16.mxu0 0
    %130 = vmatpush1.bf16.msra.mxu0 0
    %131 = vmatprep.subr.bf16.mxu0 0
    %132 = vmatpush1.bf16.msra.mxu0 0
    %133 = vmatprep.subr.bf16.mxu0 0
    %134 = vmatpush1.bf16.msra.mxu0 0
    %135 = vmatprep.mubr.bf16.mxu0 0
    %136 = vmatmul.mubr.bf16.gmra.mrb[0].mxu0 %v101
    %v137 = vpop.f32.mrb[0].mxu0
    %v138 = vadd.f32 %v80, %v137
    %v139 = vpop.f32.mrb[0].mxu0
    %v140 = vpop.f32.mrb[0].mxu0
    %v141 = vadd.f32 %v80, %v140
    %v142 = vpop.f32.mrb[0].mxu0
    %143 = vdwg.mxu0
    %v144 = vmax.f32 %v138, 0.0
    %v145 = vmax.f32 %v141, 0.0
    %v146 = vpack.c.bf16 %v145, %v144
    %v147 = vld [vmem:[#allocation7] sm:$0xf]
    %v148 = vld [vmem:[#allocation7 + $0x4] sm:$0xf]
    %v149 = vld [vmem:[#allocation7 + $0x8] sm:$0xf]
    %v150 = vld [vmem:[#allocation7 + $0xc] sm:$0xf]
    %v151 = vld [vmem:[%s4] sm:$0x1]
    %v153 = vlaneseq
    %v154 = vshrl.u32 %v153, 7
    %v155 = vsub.s32 0, %v154
    %v156 = vrot.slane %v151, %v155
    %v162 = vunpack.c.l.b16 %v147
    %v163 = vunpack.c.l.b16 %v148
    %v164 = vunpack.c.l.b16 %v149
    %v165 = vunpack.c.l.b16 %v150
    %v166 = vpack.c.b16 %v163, %v162
    %v167 = vpack.c.b16 %v165, %v164
    %v171 = vsel %vm99, %v146, 0
    %173 = vmatprep.subr.bf16.mxu0 0
    %174 = vmatpush1.bf16.msra.mxu0 %v166
    %175 = vmatprep.subr.bf16.mxu0 0
    %176 = vmatpush1.bf16.msra.mxu0 %v167
    %177 = vmatprep.subr.bf16.mxu0 0
    %178 = vmatpush1.bf16.msra.mxu0 0
    %179 = vmatprep.subr.bf16.mxu0 0
    %180 = vmatpush1.bf16.msra.mxu0 0
    %181 = vmatprep.subr.bf16.mxu0 0
    %182 = vmatpush1.bf16.msra.mxu0 0
    %183 = vmatprep.subr.bf16.mxu0 0
    %184 = vmatpush1.bf16.msra.mxu0 0
    %185 = vmatprep.subr.bf16.mxu0 0
    %186 = vmatpush1.bf16.msra.mxu0 0
    %187 = vmatprep.subr.bf16.mxu0 0
    %188 = vmatpush1.bf16.msra.mxu0 0
    %189 = vmatprep.subr.bf16.mxu0 0
    %190 = vmatpush1.bf16.msra.mxu0 0
    %191 = vmatprep.subr.bf16.mxu0 0
    %192 = vmatpush1.bf16.msra.mxu0 0
    %193 = vmatprep.subr.bf16.mxu0 0
    %194 = vmatpush1.bf16.msra.mxu0 0
    %195 = vmatprep.subr.bf16.mxu0 0
    %196 = vmatpush1.bf16.msra.mxu0 0
    %197 = vmatprep.subr.bf16.mxu0 0
    %198 = vmatpush1.bf16.msra.mxu0 0
    %199 = vmatprep.subr.bf16.mxu0 0
    %200 = vmatpush1.bf16.msra.mxu0 0
    %201 = vmatprep.subr.bf16.mxu0 0
    %202 = vmatpush1.bf16.msra.mxu0 0
    %203 = vmatprep.subr.bf16.mxu0 0
    %204 = vmatpush1.bf16.msra.mxu0 0
    %205 = vmatprep.mubr.bf16.mxu0 0
    %206 = vmatmul.mubr.bf16.gmra.mrb[0].mxu0 %v171
    %v207 = vpop.f32.mrb[0].mxu0
    %v208 = vadd.f32 %v156, %v207
    %v209 = vpop.f32.mrb[0].mxu0
    %v210 = vpop.f32.mrb[0].mxu0
    %v211 = vadd.f32 %v156, %v210
    %v212 = vpop.f32.mrb[0].mxu0
    %213 = vdwg.mxu0
    %v214 = vmax.f32 %v208, 0.0
    %v215 = vmax.f32 %v211, 0.0
    %v216 = vpack.c.bf16 %v215, %v214
    %v217 = vld [vmem:[%s5] sm:$0xf]
    %v218 = vld [vmem:[%s5 + $0x4] sm:$0xf]
    %v219 = vld [vmem:[%s5 + $0x8] sm:$0xf]
    %v220 = vld [vmem:[%s5 + $0xc] sm:$0xf]
    %v221 = vld [vmem:[%s6] sm:$0x1]
    %v223 = vlaneseq
    %v224 = vshrl.u32 %v223, 7
    %v225 = vsub.s32 0, %v224
    %v226 = vrot.slane %v221, %v225
    %v232 = vunpack.c.l.b16 %v217
    %v233 = vunpack.c.l.b16 %v218
    %v234 = vunpack.c.l.b16 %v219
    %v235 = vunpack.c.l.b16 %v220
    %v236 = vpack.c.b16 %v233, %v232
    %v237 = vpack.c.b16 %v235, %v234
    %v241 = vsel %vm99, %v216, 0
    %243 = vmatprep.subr.bf16.mxu0 0
    %244 = vmatpush1.bf16.msra.mxu0 %v236
    %245 = vmatprep.subr.bf16.mxu0 0
    %246 = vmatpush1.bf16.msra.mxu0 %v237
    %247 = vmatprep.subr.bf16.mxu0 0
    %248 = vmatpush1.bf16.msra.mxu0 0
    %249 = vmatprep.subr.bf16.mxu0 0
    %250 = vmatpush1.bf16.msra.mxu0 0
    %251 = vmatprep.subr.bf16.mxu0 0
    %252 = vmatpush1.bf16.msra.mxu0 0
    %253 = vmatprep.subr.bf16.mxu0 0
    %254 = vmatpush1.bf16.msra.mxu0 0
    %255 = vmatprep.subr.bf16.mxu0 0
    %256 = vmatpush1.bf16.msra.mxu0 0
    %257 = vmatprep.subr.bf16.mxu0 0
    %258 = vmatpush1.bf16.msra.mxu0 0
    %259 = vmatprep.subr.bf16.mxu0 0
    %260 = vmatpush1.bf16.msra.mxu0 0
    %261 = vmatprep.subr.bf16.mxu0 0
    %262 = vmatpush1.bf16.msra.mxu0 0
    %263 = vmatprep.subr.bf16.mxu0 0
    %264 = vmatpush1.bf16.msra.mxu0 0
    %265 = vmatprep.subr.bf16.mxu0 0
    %266 = vmatpush1.bf16.msra.mxu0 0
    %267 = vmatprep.subr.bf16.mxu0 0
    %268 = vmatpush1.bf16.msra.mxu0 0
    %269 = vmatprep.subr.bf16.mxu0 0
    %270 = vmatpush1.bf16.msra.mxu0 0
    %271 = vmatprep.subr.bf16.mxu0 0
    %272 = vmatpush1.bf16.msra.mxu0 0
    %273 = vmatprep.subr.bf16.mxu0 0
    %274 = vmatpush1.bf16.msra.mxu0 0
    %275 = vmatprep.mubr.bf16.mxu0 0
    %276 = vmatmul.mubr.bf16.gmra.mrb[0].mxu0 %v241
    %v277 = vpop.f32.mrb[0].mxu0
    %v278 = vadd.f32 %v226, %v277
    %v279 = vpop.f32.mrb[0].mxu0
    %v280 = vpop.f32.mrb[0].mxu0
    %v281 = vadd.f32 %v226, %v280
    %v282 = vpop.f32.mrb[0].mxu0
    %283 = vdwg.mxu0
    %284 = vst [vmem:[#allocation8] sm:$0xff] %v278
    %285 = vst [vmem:[#allocation8 + $0x8] sm:$0xff] %v281
    // Predicated region
    $region42: #{tpu_custom_call.1} parent=1 // pred_check
      _
    $region43: #{tpu_custom_call.1} parent=1 // pred_check_branch
      %287 = sbr.rel (0) target = $region45
    $region44: #{tpu_custom_call.1} parent=1 // pred_region
      %s289 = ssub.s32 256, 256
      %290 = vsyncadd [#allocation4], %s289
      %s291 = sshll.u32 [#allocation8], 4
      %s292 = int_to_ptr.vmem [resolvable:$true] %s291
      %297 = dma.vmem_to_hbm [thread:$0]  %s292, 256, %s7, [#allocation4], 128, 128, 8
    $region45: #{tpu_custom_call.1} parent=1 // pred_fallthru
      _
    // Predicated region
    $region46: #{tpu_custom_call.1} parent=1 // pred_check
      _
    $region47: #{tpu_custom_call.1} parent=1 // pred_check_branch
      %299 = sbr.rel (0) target = $region49
    $region48: #{tpu_custom_call.1} parent=1 // pred_region
      %300 = dma.done [#allocation4], 256
    $region49: #{tpu_custom_call.1} parent=1 // pred_fallthru
      _
    %301 = vsyncpa [#allocation3], 1
    %302 = vsyncpa [#allocation6], 1
    %303 = vsyncpa [#allocation4], 1

</llo_original>
